<compile_context>
chip_gen: v5e
topology: v5e:2x2
jax: 0.10.0
libtpu: 0.0.40
codegen_flags: <defaults>
</compile_context>

<pallas_src>
import jax
import jax.numpy as jnp
from jax.experimental import pallas as pl
from jax.experimental.pallas import tpu as pltpu

TEMP = 0.1        # gumbel-softmax temperature used by the module's forward
EPS = 1e-20
_LANE = 128       # TPU lane width: keep I/O blocks lane-dense
_LANE_TILE = 512  # lane tile for large meshes (multiple of 128)


def _round_up(x, m):
    return ((x + m - 1) // m) * m


def _sigmoid_exact(x):
    # Exact sigmoid via a single EUP tanh; no approx-reciprocal error for the
    # downstream 1/TEMP scale to amplify.
    return 0.5 * (1.0 + jnp.tanh(0.5 * x))


# ---------------------------------------------------------------------------
# Pallas kernel: one lane-tile of edges (lane = b*F + f, all batches merged).
# graph-conv -> relu -> graph-conv -> sigmoid -> 2-class gumbel-softmax prob.
# ---------------------------------------------------------------------------
def gedge_mask_kernel(x3_ref, gd_ref, w1ts_ref, b1t_ref, w2t3_ref, b2t_ref, y_ref):
    # x3_ref : (3, Cin, TL) bf16  edge-midpoint features per edge slot
    # gd_ref : (3, TL)      f32   gumbel noise difference g0 - g1 per edge
    # w1ts   : (H, Cin)     bf16  conv1 weight^T, pre-scaled by the 1/3 face mean
    # b1t    : (H, 1)       f32
    # w2t3   : (2, H, 1)    f32   conv2 weight^T, columns stacked
    # b2t    : (2, 1)       f32
    # y_ref  : (3, TL)      f32   gumbel-softmax class-0 probability per edge

    # GSNConv-1 aggregation: the row-normalized line-graph adjacency is a
    # block-diagonal of 3-cliques, so A @ X is the per-face mean of a face's
    # 3 edges.  The 1/3 is folded into w1ts host-side -> just two adds here.
    m1 = x3_ref[0] + x3_ref[1] + x3_ref[2]                               # (Cin, TL)

    # GSNConv-1 linear + ReLU (transposed: faces stay on the lane axis).
    h = jnp.dot(w1ts_ref[...], m1, preferred_element_type=jnp.float32)   # (H, TL)
    h = jnp.maximum(h + b1t_ref[...], 0.0)

    # GSNConv-2 aggregation: h is already face-constant (identical for the 3
    # edges of a face), so the second per-face mean is the identity.

    # GSNConv-2 linear (2 output channels): one stacked VPU multiply +
    # sublane reduce; keeps the nearly-empty 2-column matmul off the MXU.
    prod = w2t3_ref[...] * h[None, :, :]                                 # (2, H, TL)
    l01 = jnp.sum(prod, axis=1) + b2t_ref[...]                           # (2, TL)
    out01 = _sigmoid_exact(l01)                                          # (2, TL)

    # 2-class gumbel-softmax, closed form:
    #   softmax((out + g) / T)[..., 0] = sigmoid(((out0+g0) - (out1+g1)) / T)
    d = out01[0:1, :] - out01[1:2, :]                                    # (1, TL)
    y_ref[...] = _sigmoid_exact((d + gd_ref[...]) * (1.0 / TEMP))        # (3, TL)


def gedge_mask_pallas(x3, gd, w1ts, b1t, w2t3, b2t):
    """x3: (3, Cin, L) bf16 with L = B*F; gd: (3, L) f32. Returns y0: (3, L) f32."""
    _, Cin, L = x3.shape
    H = w1ts.shape[0]

    # Lane-dense tiling: one kernel call covers every batch (no B grid); large
    # meshes get a parallel grid axis over 512-lane face tiles.
    TL = _LANE_TILE if L >= _LANE_TILE else _round_up(L, _LANE)
    Lp = _round_up(L, TL)
    if Lp != L:
        x3 = jnp.pad(x3, ((0, 0), (0, 0), (0, Lp - L)))
        gd = jnp.pad(gd, ((0, 0), (0, Lp - L)))

    # VMEM per grid step (double-buffered streams): (3*Cin*2 + 3*4 + 3*4)*TL*2
    # bytes ~ 60 KiB at Cin=4, TL=512 -> far under the 32 MiB scoped limit on
    # v5e/v6e/v7x, so no vmem_limit_bytes override is needed.
    grid_spec = pltpu.PrefetchScalarGridSpec(
        num_scalar_prefetch=0,
        grid=(Lp // TL,),
        in_specs=[
            pl.BlockSpec((3, Cin, TL), lambda t: (0, 0, t)),   # x3 (streamed)
            pl.BlockSpec((3, TL),      lambda t: (0, t)),      # gd (streamed)
            pl.BlockSpec((H, Cin),     lambda t: (0, 0)),      # w1ts (resident)
            pl.BlockSpec((H, 1),       lambda t: (0, 0)),      # b1t
            pl.BlockSpec((2, H, 1),    lambda t: (0, 0, 0)),   # w2t3
            pl.BlockSpec((2, 1),       lambda t: (0, 0)),      # b2t
        ],
        out_specs=pl.BlockSpec((3, TL), lambda t: (0, t)),     # lane-dense output
    )
    y = pl.pallas_call(
        gedge_mask_kernel,
        out_shape=jax.ShapeDtypeStruct((3, Lp), jnp.float32),
        grid_spec=grid_spec,
        # Real work (face tiles) feeds both v7x TensorCores; on v5e/v6e the
        # grid is a serial loop and this annotation is documentation only.
        compiler_params=pltpu.CompilerParams(dimension_semantics=("parallel",)),
    )(x3, gd, w1ts, b1t, w2t3, b2t)
    return y[:, :L]


# ---------------------------------------------------------------------------
# JAX glue: line_mesh construction, gumbel noise, top-k straight-through mask.
# ---------------------------------------------------------------------------
def line_mesh(vertex_feat, face):
    """vertex_feat: (B, V, Cin) f32, face: (B, F, 3) int32.

    Edge-node e = k*F + f (k = edge slot (0,1),(1,2),(2,0) of face f), matching
    the torch.cat(face_edges, 0) ordering of the reference module.

    Returns:
      x3:        (3, Cin, B*F) bf16  midpoint features, channel-major, all
                                     batches merged on the lane axis (l = b*F+f)
      edge_node: (B, 3F, 2)    int32 sorted endpoint vertex indices per edge
    """
    B, F, _ = face.shape
    e01 = face[..., jnp.array([0, 1])]
    e12 = face[..., jnp.array([1, 2])]
    e20 = face[..., jnp.array([2, 0])]
    edge_node = jnp.sort(jnp.concatenate([e01, e12, e20], axis=1), axis=-1)  # (B,3F,2)

    # Gather directly in channel-major layout so no transpose over the big edge
    # axis is ever materialized; the transpose below only permutes the tiny
    # (slot, batch) leading dims and lanes stay contiguous.
    vf_cm = jnp.swapaxes(vertex_feat, 1, 2)                     # (B, Cin, V), small

    def per_b(vf, en):                                          # (Cin,V), (3F,2)
        return 0.5 * (vf[:, en[:, 0]] + vf[:, en[:, 1]])        # (Cin, 3F)

    x_edge = jax.vmap(per_b)(vf_cm, edge_node)                  # (B, Cin, 3F)
    Cin = x_edge.shape[1]
    x3 = (x_edge.reshape(B, Cin, 3, F)
                .transpose(2, 1, 0, 3)                          # (3, Cin, B, F)
                .reshape(3, Cin, B * F)
                .astype(jnp.bfloat16))                          # halve the HBM stream
    return x3, edge_node


def _edge_scores(vertex_feat, face, params, noise_key):
    """Pallas path: per-edge gumbel-softmax class-0 probability y0: (B, E)."""
    w1, b1, w2, b2 = params
    B, F, _ = face.shape
    H = w1.shape[1]
    E = 3 * F
    x3, edge_node = line_mesh(vertex_feat, face)                # (3, Cin, B*F)

    # Gumbel noise G = -log(-log(U + eps) + eps); only g0 - g1 enters the
    # 2-class softmax, so pre-difference it into the lane layout (3, B*F).
    # TODO(synk): generate this in-kernel with pltpu.prng_seed/prng_random_bits
    # to drop the (3, B*F) HBM stream; kept host-side so the reference check
    # reproduces the exact same noise from the jax.random key.
    u = jax.random.uniform(noise_key, (B, E, 2), jnp.float32)
    g = -jnp.log(-jnp.log(u + EPS) + EPS)
    gd = (g[..., 0] - g[..., 1]).reshape(B, 3, F).transpose(1, 0, 2).reshape(3, B * F)

    # Host-side parameter re-layout (tiny, one-off): fold the 1/3 face-mean
    # into w1, cast the matmul operand to bf16, stack conv2's two columns.
    w1ts = (w1.T * (1.0 / 3.0)).astype(jnp.bfloat16)            # (H, Cin)
    b1t = b1.reshape(H, 1).astype(jnp.float32)
    w2t3 = w2.T.reshape(2, H, 1).astype(jnp.float32)
    b2t = b2.reshape(2, 1).astype(jnp.float32)

    y = gedge_mask_pallas(x3, gd, w1ts, b1t, w2t3, b2t)         # (3, B*F)
    y0 = y.reshape(3, B, F).transpose(1, 0, 2).reshape(B, E)
    return y0, edge_node


def _edge_scores_dense_ref(vertex_feat, face, params, noise_key):
    """Pure-JAX f32 reference using the original dense-adjacency formulation.

    GSNConv assumed to be out = (row-normalized self-loop 3-clique) @ X @ W + b;
    verify against the real GSNConv if it uses a different normalization.
    """
    w1, b1, w2, b2 = params
    B, F, _ = face.shape
    e01 = face[..., jnp.array([0, 1])]
    e12 = face[..., jnp.array([1, 2])]
    e20 = face[..., jnp.array([2, 0])]
    edge_node = jnp.sort(jnp.concatenate([e01, e12, e20], axis=1), axis=-1)
    x_edge = jax.vmap(lambda vf, en: 0.5 * (vf[en[:, 0]] + vf[en[:, 1]]))(
        vertex_feat, edge_node)                                  # (B, E, Cin)
    E = 3 * F
    # edges of a face (indices f, F+f, 2F+f) form a row-normalized 3-clique
    a = jnp.kron(jnp.ones((3, 3), jnp.float32) / 3.0, jnp.eye(F, dtype=jnp.float32))
    u = jax.random.uniform(noise_key, (B, E, 2), jnp.float32)
    g = -jnp.log(-jnp.log(u + EPS) + EPS)
    h = jnp.maximum(jnp.einsum("ij,bjc->bic", a, x_edge) @ w1 + b1, 0.0)
    logits = jnp.einsum("ij,bjc->bic", a, h) @ w2 + b2
    out = jax.nn.sigmoid(logits)
    y = jax.nn.softmax((out + g) / TEMP, axis=-1)
    return y[..., 0], edge_node


def gedge_mask_forward(vertex_feat, face, params, noise_key, div=5):
    """Forward pass of GEdgeMask (non-vote_to_sub branch).

    Returns (b_new_pool_id, b_mask):
      b_new_pool_id: (B, 3F, 2) edge-node endpoint indices (== edge_node)
      b_mask:        (B, 3F)    straight-through top-k one-hot mask
    """
    # TODO(synk): gedge_mask_pallas has no autodiff rule; wrap in jax.custom_vjp
    # (pure-JAX backward) before training through the straight-through mask.
    y0, edge_node = _edge_scores(vertex_feat, face, params, noise_key)
    B, E = y0.shape
    k = E // div
    _, idx = jax.lax.top_k(y0, k)
    y_hard = jax.vmap(lambda z, i: z.at[i].set(1.0))(jnp.zeros_like(y0), idx)
    # straight-through estimator: forward value = y_hard, gradient flows via y0
    b_mask = jax.lax.stop_gradient(y_hard - y0) + y0
    return edge_node, b_mask
    # TODO(synk): new_faces / new_edges reconstruction (dynamic-shape topology
    # rewrite) and the vote_to_sub ChamferDistance branch are not implemented.


# ---------------------------------------------------------------------------
# main
# ---------------------------------------------------------------------------
if __name__ == "__main__":
    key = jax.random.PRNGKey(0)
    B, V, Cin, F, H = 2, 32, 4, 64, 32   # E = 3F = 192 edge-nodes, B*F = 128 lanes

    kv, kf, kw1, kw2, kn = jax.random.split(key, 5)
    vertex_feat = jax.random.normal(kv, (B, V, Cin), jnp.float32)
    face = jax.random.randint(kf, (B, F, 3), 0, V, jnp.int32)

    # deterministic parameter init (GSNConv(Cin,H) and GSNConv(H,2))
    w1 = 0.1 * jax.random.normal(kw1, (Cin, H), jnp.float32)
    b1 = jnp.zeros((1, H), jnp.float32)
    w2 = 0.1 * jax.random.normal(kw2, (H, 2), jnp.float32)
    b2 = jnp.zeros((1, 2), jnp.float32)
    params = (w1, b1, w2, b2)

    pool_id, mask = gedge_mask_forward(vertex_feat, face, params, kn, div=5)
    jax.block_until_ready((pool_id, mask))

    # sanity: Pallas (lane-merged, face-collapsed, bf16 matmul) vs the dense
    # f32 adjacency reference, using identical gumbel noise.
    y0_pallas, _ = _edge_scores(vertex_feat, face, params, kn)
    y0_ref, _ = _edge_scores_dense_ref(vertex_feat, face, params, kn)
    jax.block_until_ready((y0_pallas, y0_ref))
    assert jnp.allclose(y0_pallas, y0_ref, atol=5e-2), "kernel mismatch vs reference"

    assert pool_id.shape == (B, 3 * F, 2)
    assert mask.shape == (B, 3 * F)
    assert int((mask > 0.5).sum()) == B * ((3 * F) // 5)
    print("KERNEL_OK")
</pallas_src>

<mosaic_0001>
module attributes {stable_mosaic.version = 11 : i64} {
  func.func @gedge_mask_kernel(%arg0: i32, %arg1: memref<3x4x128xbf16, #tpu.memory_space<vmem>>, %arg2: memref<3x128xf32, #tpu.memory_space<vmem>>, %arg3: memref<32x4xbf16, #tpu.memory_space<vmem>>, %arg4: memref<32x1xf32, #tpu.memory_space<vmem>>, %arg5: memref<2x32x1xf32, #tpu.memory_space<vmem>>, %arg6: memref<2x1xf32, #tpu.memory_space<vmem>>, %arg7: memref<3x128xf32, #tpu.memory_space<vmem>>) attributes {dimension_semantics = [#tpu.dimension_semantics<parallel>], iteration_bounds = array<i64: 1>, scalar_prefetch = 0 : i64, scratch_operands = 0 : i64, tpu.core_type = #tpu.core_type<tc>, window_params = [{transform_indices = @transform_0, window_bounds = array<i64: 3, 4, 128>}, {transform_indices = @transform_1, window_bounds = array<i64: 3, 128>}, {pipeline_mode = #tpu.pipeline_mode<synchronous>, transform_indices = @transform_2, window_bounds = array<i64: 32, 4>}, {pipeline_mode = #tpu.pipeline_mode<synchronous>, transform_indices = @transform_3, window_bounds = array<i64: 32, 1>}, {pipeline_mode = #tpu.pipeline_mode<synchronous>, transform_indices = @transform_4, window_bounds = array<i64: 2, 32, 1>}, {pipeline_mode = #tpu.pipeline_mode<synchronous>, transform_indices = @transform_5, window_bounds = array<i64: 2, 1>}, {transform_indices = @transform_6, window_bounds = array<i64: 3, 128>}]} {
    %c0 = arith.constant 0 : index
    %c0_0 = arith.constant 0 : index
    %c0_1 = arith.constant 0 : index
    %0 = vector.load %arg1[%c0, %c0_0, %c0_1] : memref<3x4x128xbf16, #tpu.memory_space<vmem>>, vector<1x4x128xbf16>
    %1 = vector.shape_cast %0 : vector<1x4x128xbf16> to vector<4x128xbf16>
    %c1 = arith.constant 1 : index
    %c0_2 = arith.constant 0 : index
    %c0_3 = arith.constant 0 : index
    %2 = vector.load %arg1[%c1, %c0_2, %c0_3] : memref<3x4x128xbf16, #tpu.memory_space<vmem>>, vector<1x4x128xbf16>
    %3 = vector.shape_cast %2 : vector<1x4x128xbf16> to vector<4x128xbf16>
    %4 = arith.addf %1, %3 : vector<4x128xbf16>
    %c2 = arith.constant 2 : index
    %c0_4 = arith.constant 0 : index
    %c0_5 = arith.constant 0 : index
    %5 = vector.load %arg1[%c2, %c0_4, %c0_5] : memref<3x4x128xbf16, #tpu.memory_space<vmem>>, vector<1x4x128xbf16>
    %6 = vector.shape_cast %5 : vector<1x4x128xbf16> to vector<4x128xbf16>
    %7 = arith.addf %4, %6 : vector<4x128xbf16>
    %c0_6 = arith.constant 0 : index
    %c0_7 = arith.constant 0 : index
    %8 = vector.load %arg3[%c0_6, %c0_7] : memref<32x4xbf16, #tpu.memory_space<vmem>>, vector<32x4xbf16>
    %cst = arith.constant dense<0.000000e+00> : vector<32x128xf32>
    %9 = tpu.matmul %8, %7, %cst {dimension_numbers = #tpu.dot_dimension_numbers<[1], [0], [0], [1], [0, 0, 1, 1], [], []>} : vector<32x4xbf16>, vector<4x128xbf16>, vector<32x128xf32> -> vector<32x128xf32>
    %c0_8 = arith.constant 0 : index
    %c0_9 = arith.constant 0 : index
    %10 = vector.load %arg4[%c0_8, %c0_9] : memref<32x1xf32, #tpu.memory_space<vmem>>, vector<32x1xf32>
    %11 = vector.broadcast %10 : vector<32x1xf32> to vector<32x128xf32>
    %12 = arith.addf %9, %11 : vector<32x128xf32>
    %cst_10 = arith.constant 0.000000e+00 : f32
    %13 = vector.broadcast %cst_10 : f32 to vector<32x128xf32>
    %14 = arith.maximumf %12, %13 : vector<32x128xf32>
    %c0_11 = arith.constant 0 : index
    %c0_12 = arith.constant 0 : index
    %c0_13 = arith.constant 0 : index
    %15 = vector.load %arg5[%c0_11, %c0_12, %c0_13] : memref<2x32x1xf32, #tpu.memory_space<vmem>>, vector<2x32x1xf32>
    %16 = vector.shape_cast %14 : vector<32x128xf32> to vector<1x32x128xf32>
    %17 = vector.broadcast %15 : vector<2x32x1xf32> to vector<2x32x128xf32>
    %18 = vector.broadcast %16 : vector<1x32x128xf32> to vector<2x32x128xf32>
    %19 = arith.mulf %17, %18 : vector<2x32x128xf32>
    %cst_14 = arith.constant dense<0.000000e+00> : vector<2x128xf32>
    %20 = vector.multi_reduction <add>, %19, %cst_14 [1] : vector<2x32x128xf32> to vector<2x128xf32>
    %c0_15 = arith.constant 0 : index
    %c0_16 = arith.constant 0 : index
    %21 = vector.load %arg6[%c0_15, %c0_16] : memref<2x1xf32, #tpu.memory_space<vmem>>, vector<2x1xf32>
    %22 = vector.broadcast %21 : vector<2x1xf32> to vector<2x128xf32>
    %23 = arith.addf %20, %22 : vector<2x128xf32>
    %cst_17 = arith.constant 5.000000e-01 : f32
    %24 = vector.broadcast %cst_17 : f32 to vector<2x128xf32>
    %25 = arith.mulf %24, %23 : vector<2x128xf32>
    %26 = math.tanh %25 : vector<2x128xf32>
    %cst_18 = arith.constant 1.000000e+00 : f32
    %27 = vector.broadcast %cst_18 : f32 to vector<2x128xf32>
    %28 = arith.addf %27, %26 : vector<2x128xf32>
    %cst_19 = arith.constant 5.000000e-01 : f32
    %29 = vector.broadcast %cst_19 : f32 to vector<2x128xf32>
    %30 = arith.mulf %29, %28 : vector<2x128xf32>
    %31 = vector.extract_strided_slice %30 {offsets = [0, 0], sizes = [1, 128], strides = [1, 1]} : vector<2x128xf32> to vector<1x128xf32>
    %32 = vector.extract_strided_slice %30 {offsets = [1, 0], sizes = [1, 128], strides = [1, 1]} : vector<2x128xf32> to vector<1x128xf32>
    %33 = arith.subf %31, %32 : vector<1x128xf32>
    %c0_20 = arith.constant 0 : index
    %c0_21 = arith.constant 0 : index
    %34 = vector.load %arg2[%c0_20, %c0_21] : memref<3x128xf32, #tpu.memory_space<vmem>>, vector<3x128xf32>
    %35 = vector.broadcast %33 : vector<1x128xf32> to vector<3x128xf32>
    %36 = arith.addf %35, %34 : vector<3x128xf32>
    %cst_22 = arith.constant 1.000000e+01 : f32
    %37 = vector.broadcast %cst_22 : f32 to vector<3x128xf32>
    %38 = arith.mulf %36, %37 : vector<3x128xf32>
    %cst_23 = arith.constant 5.000000e-01 : f32
    %39 = vector.broadcast %cst_23 : f32 to vector<3x128xf32>
    %40 = arith.mulf %39, %38 : vector<3x128xf32>
    %41 = math.tanh %40 : vector<3x128xf32>
    %cst_24 = arith.constant 1.000000e+00 : f32
    %42 = vector.broadcast %cst_24 : f32 to vector<3x128xf32>
    %43 = arith.addf %42, %41 : vector<3x128xf32>
    %cst_25 = arith.constant 5.000000e-01 : f32
    %44 = vector.broadcast %cst_25 : f32 to vector<3x128xf32>
    %45 = arith.mulf %44, %43 : vector<3x128xf32>
    %c0_26 = arith.constant 0 : index
    %c0_27 = arith.constant 0 : index
    %46 = vector.load %arg7[%c0_26, %c0_27] : memref<3x128xf32, #tpu.memory_space<vmem>>, vector<3x128xf32>
    tpu.vector_store %arg7[%c0_26, %c0_27], %45 {strides = array<i32>} : memref<3x128xf32, #tpu.memory_space<vmem>>, vector<3x128xf32>,
    return
  }
  func.func @transform_0(%arg0: i32) -> (i32, i32, i32) {
    %c0_i32 = arith.constant 0 : i32
    %c0_i32_0 = arith.constant 0 : i32
    %c0_i32_1 = arith.constant 0 : i32
    return %c0_i32, %c0_i32_0, %arg0 : i32, i32, i32
  }
  func.func @transform_1(%arg0: i32) -> (i32, i32) {
    %c0_i32 = arith.constant 0 : i32
    %c0_i32_0 = arith.constant 0 : i32
    return %c0_i32, %arg0 : i32, i32
  }
  func.func @transform_2(%arg0: i32) -> (i32, i32) {
    %c0_i32 = arith.constant 0 : i32
    %c0_i32_0 = arith.constant 0 : i32
    %c0_i32_1 = arith.constant 0 : i32
    return %c0_i32, %c0_i32_0 : i32, i32
  }
  func.func @transform_3(%arg0: i32) -> (i32, i32) {
    %c0_i32 = arith.constant 0 : i32
    %c0_i32_0 = arith.constant 0 : i32
    %c0_i32_1 = arith.constant 0 : i32
    return %c0_i32, %c0_i32_0 : i32, i32
  }
  func.func @transform_4(%arg0: i32) -> (i32, i32, i32) {
    %c0_i32 = arith.constant 0 : i32
    %c0_i32_0 = arith.constant 0 : i32
    %c0_i32_1 = arith.constant 0 : i32
    %c0_i32_2 = arith.constant 0 : i32
    return %c0_i32, %c0_i32_0, %c0_i32_1 : i32, i32, i32
  }
  func.func @transform_5(%arg0: i32) -> (i32, i32) {
    %c0_i32 = arith.constant 0 : i32
    %c0_i32_0 = arith.constant 0 : i32
    %c0_i32_1 = arith.constant 0 : i32
    return %c0_i32, %c0_i32_0 : i32, i32
  }
  func.func @transform_6(%arg0: i32) -> (i32, i32) {
    %c0_i32 = arith.constant 0 : i32
    %c0_i32_0 = arith.constant 0 : i32
    return %c0_i32, %arg0 : i32, i32
  }
}

</mosaic_0001>

<llo_original>
// kernel: tpu_custom_call.1
$region0: #{tpu_custom_call.1}
  #allocation0 [shape = 'u32[]', space=smem, size = 0x4, offset = 0x4, fixed_abs, tag = 'smem constant byte address 0x4 - core index']
  #allocation1 [shape = 'u32[72,128]{1,0:T(1,128)}', space=vmem, size = 0x9000, scoped, tag = 'internal scratch']
  %s0 = inlined_call_operand.vmem [shape: bf16[3,4,128], index: 0, kind: input, shape index: {}]
  %s1 = inlined_call_operand.vmem [shape: f32[3,128], index: 1, kind: input, shape index: {}]
  %s2 = inlined_call_operand.vmem [shape: bf16[32,4], index: 2, kind: input, shape index: {}]
  %s3 = inlined_call_operand.vmem [shape: f32[32,1], index: 3, kind: input, shape index: {}]
  %s4 = inlined_call_operand.vmem [shape: f32[2,32,1], index: 4, kind: input, shape index: {}]
  %s5 = inlined_call_operand.vmem [shape: f32[2,1], index: 5, kind: input, shape index: {}]
  %s6 = inlined_call_operand.hbm [shape: f32[3,128], index: 6, kind: output, shape index: {}]
  %s7 = sld [smem:[#allocation0]]
  $region34: #{tpu_custom_call.1} parent=0
    _
  %s9 = ssub.s32 1, %s7
  %s10 = scalar_select 0, %s9, %s7
  $region1: #{tpu_custom_call.1} parent=0
    #allocation2 [shape = 'u8[2048]{0}', space=vmem, size = 0x800, scoped, tag = 'output window, operand 0, single buffered']
    #allocation3 [shape = 's32[1]{0}', space=sflag, size = 0x4, scoped, tag = 'scoped memory for tpu_custom_call.1']
    %11 = vsyncpa [#allocation3], 0
    // Predicated region
    $region2: #{tpu_custom_call.1} parent=1 // pred_check
      _
    $region3: #{tpu_custom_call.1} parent=1 // pred_check_branch
      %13 = sbr.rel (0) target = $region5
    $region4: #{tpu_custom_call.1} parent=1 // pred_region
      _
    $region5: #{tpu_custom_call.1} parent=1 // pred_fallthru
      _
    // Predicated region
    $region6: #{tpu_custom_call.1} parent=1 // pred_check
      _
    $region7: #{tpu_custom_call.1} parent=1 // pred_check_branch
      %15 = sbr.rel (0) target = $region9
    $region8: #{tpu_custom_call.1} parent=1 // pred_region
      _
    $region9: #{tpu_custom_call.1} parent=1 // pred_fallthru
      _
    // Predicated region
    $region10: #{tpu_custom_call.1} parent=1 // pred_check
      _
    $region11: #{tpu_custom_call.1} parent=1 // pred_check_branch
      %17 = sbr.rel (0) target = $region13
    $region12: #{tpu_custom_call.1} parent=1 // pred_region
      _
    $region13: #{tpu_custom_call.1} parent=1 // pred_fallthru
      _
    // Predicated region
    $region14: #{tpu_custom_call.1} parent=1 // pred_check
      _
    $region15: #{tpu_custom_call.1} parent=1 // pred_check_branch
      %19 = sbr.rel (0) target = $region17
    $region16: #{tpu_custom_call.1} parent=1 // pred_region
      _
    $region17: #{tpu_custom_call.1} parent=1 // pred_fallthru
      _
    // Predicated region
    $region18: #{tpu_custom_call.1} parent=1 // pred_check
      _
    $region19: #{tpu_custom_call.1} parent=1 // pred_check_branch
      %21 = sbr.rel (0) target = $region21
    $region20: #{tpu_custom_call.1} parent=1 // pred_region
      _
    $region21: #{tpu_custom_call.1} parent=1 // pred_fallthru
      _
    // Predicated region
    $region22: #{tpu_custom_call.1} parent=1 // pred_check
      _
    $region23: #{tpu_custom_call.1} parent=1 // pred_check_branch
      %23 = sbr.rel (0) target = $region25
    $region24: #{tpu_custom_call.1} parent=1 // pred_region
      _
    $region25: #{tpu_custom_call.1} parent=1 // pred_fallthru
      _
    %v25 = vld [vmem:[%s0] sm:$0x3]
    %s26 = scalar_lea.vmem %s0, 2
    %v27 = vld [vmem:[%s26] sm:$0x3]
    %v28 = vunpack.c.l.bf16 %v25
    %v29 = vunpack.c.l.bf16 %v27
    %v30 = vadd.f32 %v28, %v29
    %v31 = vpack.c.bf16 %v30, %v30
    %s32 = scalar_lea.vmem %s0, 4
    %v33 = vld [vmem:[%s32] sm:$0x3]
    %v34 = vunpack.c.l.bf16 %v31
    %v35 = vunpack.c.l.bf16 %v33
    %v36 = vadd.f32 %v34, %v35
    %v37 = vpack.c.bf16 %v36, %v36
    %v38 = vld [vmem:[%s2] sm:$0xf]
    %v39 = vld [vmem:[%s2 + $0x4] sm:$0xf]
    %v40 = vld [vmem:[%s2 + $0x8] sm:$0xf]
    %v41 = vld [vmem:[%s2 + $0xc] sm:$0xf]
    %v42 = vld [vmem:[%s3] sm:$0xff]
    %v43 = vld [vmem:[%s3 + $0x8] sm:$0xff]
    %v44 = vld [vmem:[%s3 + $0x10] sm:$0xff]
    %v45 = vld [vmem:[%s3 + $0x18] sm:$0xff]
    %47 = vset.pattern.permute.xlu0 0
    %48 = vperm.xlu0 %47, %v42
    %v49 = vpop.permute.xlu0 %48
    %52 = vset.pattern.permute.xlu0 0
    %53 = vperm.xlu0 %52, %v43
    %v54 = vpop.permute.xlu0 %53
    %57 = vset.pattern.permute.xlu0 0
    %58 = vperm.xlu0 %57, %v44
    %v59 = vpop.permute.xlu0 %58
    %62 = vset.pattern.permute.xlu0 0
    %63 = vperm.xlu0 %62, %v45
    %v64 = vpop.permute.xlu0 %63
    %v70 = vunpack.c.l.b16 %v38
    %v71 = vunpack.c.l.b16 %v39
    %v72 = vunpack.c.l.b16 %v40
    %v73 = vunpack.c.l.b16 %v41
    %v74 = vpack.c.b16 %v71, %v70
    %v75 = vpack.c.b16 %v73, %v72
    %vm76 = vcmask 31744
    %v78 = vsel %vm76, %v74, 0
    %v81 = vsel %vm76, %v75, 0
    %vm83 = vcmask 1041408
    %v85 = vsel %vm83, %v37, 0
    %87 = vmatpush.bf16.msra.mxu0 0
    %88 = vmatpush.bf16.msra.mxu0 0
    %89 = vmatpush.bf16.msra.mxu0 0
    %90 = vmatpush.bf16.msra.mxu0 0
    %91 = vmatpush.bf16.msra.mxu0 0
    %92 = vmatpush.bf16.msra.mxu0 0
    %93 = vmatpush.bf16.msra.mxu0 0
    %94 = vmatpush.bf16.msra.mxu0 %v85
    %95 = vmatmul.bf16.gmra.mxu0 %v78
    %v96 = vpop.f32.mrf.mxu0
    %v97 = vadd.f32 %v49, %v96
    %v98 = vpop.f32.mrf.mxu0
    %v99 = vadd.f32 %v54, %v98
    %100 = vmatmul.bf16.gmra.mxu0 %v81
    %v101 = vpop.f32.mrf.mxu0
    %v102 = vadd.f32 %v59, %v101
    %v103 = vpop.f32.mrf.mxu0
    %v104 = vadd.f32 %v64, %v103
    %105 = vdwg.mxu0
    %v106 = vmax.f32 %v97, 0.0
    %v107 = vmax.f32 %v99, 0.0
    %v108 = vmax.f32 %v102, 0.0
    %v109 = vmax.f32 %v104, 0.0
    %v110 = vld [vmem:[%s4] sm:$0xff]
    %v111 = vld [vmem:[%s4 + $0x8] sm:$0xff]
    %v112 = vld [vmem:[%s4 + $0x10] sm:$0xff]
    %v113 = vld [vmem:[%s4 + $0x18] sm:$0xff]
    %v114 = vld [vmem:[%s4 + $0x20] sm:$0xff]
    %v115 = vld [vmem:[%s4 + $0x28] sm:$0xff]
    %v116 = vld [vmem:[%s4 + $0x30] sm:$0xff]
    %v117 = vld [vmem:[%s4 + $0x38] sm:$0xff]
    %119 = vset.pattern.permute.xlu0 0
    %120 = vperm.xlu0 %119, %v110
    %v121 = vpop.permute.xlu0 %120
    %124 = vset.pattern.permute.xlu0 0
    %125 = vperm.xlu0 %124, %v111
    %v126 = vpop.permute.xlu0 %125
    %129 = vset.pattern.permute.xlu0 0
    %130 = vperm.xlu0 %129, %v112
    %v131 = vpop.permute.xlu0 %130
    %134 = vset.pattern.permute.xlu0 0
    %135 = vperm.xlu0 %134, %v113
    %v136 = vpop.permute.xlu0 %135
    %139 = vset.pattern.permute.xlu0 0
    %140 = vperm.xlu0 %139, %v114
    %v141 = vpop.permute.xlu0 %140
    %144 = vset.pattern.permute.xlu0 0
    %145 = vperm.xlu0 %144, %v115
    %v146 = vpop.permute.xlu0 %145
    %149 = vset.pattern.permute.xlu0 0
    %150 = vperm.xlu0 %149, %v116
    %v151 = vpop.permute.xlu0 %150
    %154 = vset.pattern.permute.xlu0 0
    %155 = vperm.xlu0 %154, %v117
    %v156 = vpop.permute.xlu0 %155
    %v158 = vmul.f32 %v121, %v106
    %v159 = vmul.f32 %v126, %v107
    %v160 = vmul.f32 %v131, %v108
    %v161 = vmul.f32 %v136, %v109
    %v162 = vmul.f32 %v141, %v106
    %v163 = vmul.f32 %v146, %v107
    %v164 = vmul.f32 %v151, %v108
    %v165 = vmul.f32 %v156, %v109
    %v166 = vadd.f32 %v158, %v159
    %v167 = vadd.f32 %v166, %v160
    %v168 = vadd.f32 %v167, %v161
    %v169 = vrot.slane %v168, 4
    %v170 = vadd.f32 %v168, %v169
    %v171 = vrot.slane %v170, 2
    %v172 = vadd.f32 %v170, %v171
    %v173 = vrot.slane %v172, 1
    %v174 = vadd.f32 %v172, %v173
    %v175 = vadd.f32 %v162, %v163
    %v176 = vadd.f32 %v175, %v164
    %v177 = vadd.f32 %v176, %v165
    %v178 = vrot.slane %v177, 4
    %v179 = vadd.f32 %v177, %v178
    %v180 = vrot.slane %v179, 2
    %v181 = vadd.f32 %v179, %v180
    %v182 = vrot.slane %v181, 1
    %v183 = vadd.f32 %v181, %v182
    %v184 = vld [vmem:[%s5] sm:$0x3]
    %186 = vset.pattern.permute.xlu0 0
    %187 = vperm.xlu0 %186, %v184
    %v188 = vpop.permute.xlu0 %187
    %v189 = vrot.slane %v188, 1
    %v192 = vadd.f32 %v174, %v188
    %v193 = vadd.f32 %v183, %v189
    %v194 = vmul.f32 %v192, 0.5
    %v195 = vmul.f32 %v193, 0.5
    %v196 = vtanh.pop %v194
    %v197 = vtanh.pop %v195
    %v198 = vadd.f32 %v196, 1.0
    %v199 = vadd.f32 %v197, 1.0
    %v200 = vmul.f32 %v198, 0.5
    %v201 = vmul.f32 %v199, 0.5
    %v202 = vsub.f32 %v200, %v201
    %v203 = vld [vmem:[%s1] sm:$0x7]
    %v204 = vperm.slane %v202, 0
    %v205 = vadd.f32 %v204, %v203
    %v206 = vmul.f32 %v205, 10.0
    %v207 = vmul.f32 %v206, 0.5
    %v208 = vtanh.pop %v207
    %v209 = vadd.f32 %v208, 1.0
    %v210 = vmul.f32 %v209, 0.5
    %211 = vst [vmem:[#allocation2] sm:$0x7] %v210
    // Predicated region
    $region26: #{tpu_custom_call.1} parent=1 // pred_check
      _
    $region27: #{tpu_custom_call.1} parent=1 // pred_check_branch
      %213 = sbr.rel (0) target = $region29
    $region28: #{tpu_custom_call.1} parent=1 // pred_region
      %215 = vsyncadd [#allocation3], 0
      %s217 = sshll.u32 [#allocation2], 4
      %s218 = int_to_ptr.vmem [resolvable:$true] %s217
      %s219 = sshll.u32 %s6, 4
      %s220 = int_to_ptr.hbm [resolvable:$true] %s219
      %222 = dma.vmem_to_hbm [thread:$0]  %s218, 64, %s220, [#allocation3]
    $region29: #{tpu_custom_call.1} parent=1 // pred_fallthru
      _
    // Predicated region
    $region30: #{tpu_custom_call.1} parent=1 // pred_check
      _
    $region31: #{tpu_custom_call.1} parent=1 // pred_check_branch
      %224 = sbr.rel (0) target = $region33
    $region32: #{tpu_custom_call.1} parent=1 // pred_region
      %226 = dma.done [#allocation3], 64
    $region33: #{tpu_custom_call.1} parent=1 // pred_fallthru
      _
    %227 = vsyncpa [#allocation3], 1

</llo_original>
